<compile_context>
chip_gen: v7x
topology: tpu7x:2x2x1
jax: 0.10.0
libtpu: 0.0.40
codegen_flags: <defaults>
</compile_context>

<pallas_src>
import functools

import jax
import jax.numpy as jnp
from jax import lax
from jax.experimental import pallas as pl
from jax.experimental.pallas import tpu as pltpu

SMOOTH = 1.0   # BinaryDiceLoss default
ALPHA = 0.25   # FocalLoss default
GAMMA = 2.0    # FocalLoss default (== 2 -> explicit squaring below)
# TODO(synk): `weight` / `ignore_index` constructor options not implemented (defaults are None).


def _fl_plus_dice_kernel(cls_ref, p_ref, lab_ref, num_ref, den_ref, fl_ref, *,
                         approx_recip):
    """Grid = (n_split [parallel], steps [arbitrary/reduction]).

    cls_ref : (1, C, 8, 128) int32 channel indices (tiny constant input).
    p_ref   : (N, C, Sb, 128) logits block (spatial rows on sublanes/lanes).
    lab_ref : (N, Sb, 128)    int32 class labels (-1 marks padded pixels).
    num/den/fl_ref : (N, C, 8, 128) f32 lane/sublane-dense partial sums, resident
                     across the inner (reduction) grid axis.
    """
    _, _, Sb, _ = p_ref.shape
    n_chunks = Sb // 8
    j = pl.program_id(1)

    def recip(v):
        if approx_recip:
            return pl.reciprocal(v, approx=True)
        return 1.0 / v

    cls = cls_ref[...]                                            # (1, C, 8, 128)

    def chunk(k, carry):
        num_acc, den_acc, fl_acc = carry
        r0 = pl.multiple_of(k * 8, 8)
        x = p_ref[:, :, pl.ds(r0, 8), :].astype(jnp.float32)      # (N, C, 8, 128)
        lab = lab_ref[:, pl.ds(r0, 8), :]                         # (N, 8, 128)

        lab_e = lab[:, None, :, :]                                # (N, 1, 8, 128)
        tgt = (lab_e == cls).astype(jnp.float32)                  # one-hot (N,C,8,128)
        valid = (lab_e >= 0).astype(jnp.float32)                  # (N, 1, 8, 128)

        # ---- Dice branch: softmax over channel (leading) axis -> pure VPU ----
        m = jnp.max(x, axis=1, keepdims=True)
        e = jnp.exp(x - m)
        probs = e * recip(jnp.sum(e, axis=1, keepdims=True))      # 1 recip per pixel

        num_acc = num_acc + probs * tgt                           # dice numerator
        den_acc = den_acc + (probs * probs) * valid + tgt         # p=2; tgt^2 == tgt

        # ---- Focal branch: binary focal on sigmoid(x), gamma == 2 ----
        # z = exp(-|x|): log_pt = min(x,0)-log1p(z); log(1-pt) = min(-x,0)-log1p(z);
        # pt = sigmoid(x) from one reciprocal (no exp(log_pt)).  Numerically stable.
        z = jnp.exp(-jnp.abs(x))
        log1p_z = jnp.log1p(z)
        log_pt = jnp.minimum(x, 0.0) - log1p_z
        log_1m_pt = jnp.minimum(-x, 0.0) - log1p_z
        inv1pz = recip(1.0 + z)
        pt = jnp.where(x >= 0, inv1pz, z * inv1pz)
        one_m_pt = 1.0 - pt

        fl_pos = (-ALPHA) * (one_m_pt * one_m_pt) * log_pt
        fl_neg = (-(1.0 - ALPHA)) * (pt * pt) * log_1m_pt
        # (valid - tgt) == (1 - tgt) on real pixels and 0 on padded pixels.
        fl_acc = fl_acc + tgt * fl_pos + (valid - tgt) * fl_neg
        return num_acc, den_acc, fl_acc

    zero = jnp.zeros(num_ref.shape, jnp.float32)
    num_acc, den_acc, fl_acc = lax.fori_loop(0, n_chunks, chunk, (zero, zero, zero))

    # One accumulator write / RMW per grid step (not per chunk).
    @pl.when(j == 0)
    def _():
        num_ref[...] = num_acc
        den_ref[...] = den_acc
        fl_ref[...] = fl_acc

    @pl.when(j > 0)
    def _():
        num_ref[...] += num_acc
        den_ref[...] += den_acc
        fl_ref[...] += fl_acc


def _vmem_budgets():
    """(vmem_limit_bytes, per-step double-buffered input budget), per TPU generation."""
    try:
        phys = pltpu.get_tpu_info().vmem_capacity_bytes
    except Exception:
        phys = 64 << 20
    if phys >= (100 << 20):            # v5e / v6e: 128 MiB physical VMEM
        return 80 << 20, 28 << 20
    return 48 << 20, 16 << 20          # v7x: 64 MiB per TensorCore


def _ceil_to(x, m):
    return -(-x // m) * m


def fl_plus_dice(predict, target, *, approx_recip=False, logits_dtype=jnp.float32):
    """predict, target: (N, C, H, W) float; target one-hot along C (module contract).

    `logits_dtype=jnp.bfloat16` halves the dominant HBM stream on mem-bound v5e/v6e
    (in-kernel math stays f32); `approx_recip=True` trades ~1e-3 relative error for
    fewer EUP cycles on v7x.
    """
    assert predict.shape == target.shape
    N, C, H, W = predict.shape
    HW = H * W

    vmem_limit, input_budget = _vmem_budgets()

    # ---- geometry: pixels -> 128-lane rows; 2 splits so both v7x cores get work ----
    n_split = 2
    S = _ceil_to(pl.cdiv(HW, 128), 8)                    # sublane rows, 8-aligned
    rps = _ceil_to(pl.cdiv(S, n_split), 8)               # rows per split
    p_bytes = jnp.dtype(logits_dtype).itemsize
    row_bytes = 2 * 128 * (N * C * p_bytes + N * 4)      # double-buffered logits+labels
    sb_budget = max(8, (input_budget // row_bytes) // 8 * 8)
    steps = pl.cdiv(rps, sb_budget)
    Sb = _ceil_to(pl.cdiv(rps, steps), 8)                # block rows per grid step
    S_pad = n_split * steps * Sb
    HW_pad = S_pad * 128

    # ---- inputs: logits + int32 class labels (one-hot rebuilt in-kernel) ----
    p = predict.reshape(N, C, HW).astype(logits_dtype)
    # TODO(synk): label streaming assumes hard one-hot targets (the module contract);
    # soft labels would need a dense-target path.
    lab = jnp.argmax(target, axis=1).astype(jnp.int32).reshape(N, HW)
    if HW_pad != HW:
        p = jnp.pad(p, ((0, 0), (0, 0), (0, HW_pad - HW)))
        lab = jnp.pad(lab, ((0, 0), (0, HW_pad - HW)), constant_values=-1)
    p4 = p.reshape(N, C, S_pad, 128)
    lab4 = lab.reshape(N, S_pad, 128)
    cls = jnp.broadcast_to(jnp.arange(C, dtype=jnp.int32).reshape(1, C, 1, 1),
                           (1, C, 8, 128))

    kernel = functools.partial(_fl_plus_dice_kernel, approx_recip=approx_recip)
    part_shape = jax.ShapeDtypeStruct((n_split, N, C, 8, 128), jnp.float32)
    out_map = lambda i, j: (i, 0, 0, 0, 0)

    num_p, den_p, fl_p = pl.pallas_call(
        kernel,
        out_shape=(part_shape, part_shape, part_shape),
        grid_spec=pltpu.PrefetchScalarGridSpec(
            num_scalar_prefetch=0,
            grid=(n_split, steps),
            in_specs=[
                pl.BlockSpec((1, C, 8, 128), lambda i, j: (0, 0, 0, 0)),
                pl.BlockSpec((N, C, Sb, 128), lambda i, j: (0, 0, i * steps + j, 0)),
                pl.BlockSpec((N, Sb, 128), lambda i, j: (0, i * steps + j, 0)),
            ],
            out_specs=[
                pl.BlockSpec((None, N, C, 8, 128), out_map),   # dice numerator partials
                pl.BlockSpec((None, N, C, 8, 128), out_map),   # dice denominator partials
                pl.BlockSpec((None, N, C, 8, 128), out_map),   # focal partial sums
            ],
        ),
        compiler_params=pltpu.CompilerParams(
            dimension_semantics=("parallel", "arbitrary"),
            vmem_limit_bytes=vmem_limit,
        ),
    )(cls, p4, lab4)

    # ---- tiny JAX epilogue: cross-lane / cross-split reduction + final loss math ----
    num = jnp.sum(num_p, axis=(0, 3, 4)) + SMOOTH        # (N, C)
    den = jnp.sum(den_p, axis=(0, 3, 4)) + SMOOTH        # (N, C)
    dice_loss = jnp.mean(1.0 - num / den)                # mean over (n, c)
    focal_loss = jnp.sum(fl_p) / float(N * C * HW)       # mean over all real elements
    return dice_loss + focal_loss


def _reference(predict, target):
    """Pure-JAX reference matching the PyTorch DiceLoss + FocalLoss defaults."""
    N, C, H, W = predict.shape
    probs = jax.nn.softmax(predict, axis=1)
    p2 = probs.reshape(N, C, -1)
    t2 = target.reshape(N, C, -1)
    num = jnp.sum(p2 * t2, axis=2) + SMOOTH
    den = jnp.sum(p2 ** 2 + t2 ** 2, axis=2) + SMOOTH
    dice_loss = jnp.mean(1.0 - num / den)

    pt = jax.nn.sigmoid(predict)
    fl = (-ALPHA * (1.0 - pt) ** GAMMA * target * jax.nn.log_sigmoid(predict)
          - (1.0 - ALPHA) * pt ** GAMMA * (1.0 - target) * jax.nn.log_sigmoid(-predict))
    return dice_loss + jnp.mean(fl)


if __name__ == "__main__":
    key = jax.random.PRNGKey(0)
    k1, k2 = jax.random.split(key)

    N, C, H, W = 2, 4, 16, 16
    predict = jax.random.normal(k1, (N, C, H, W), dtype=jnp.float32)
    labels = jax.random.randint(k2, (N, H, W), 0, C)
    target = jax.nn.one_hot(labels, C, axis=1, dtype=jnp.float32)  # NCHW one-hot

    loss = fl_plus_dice(predict, target)
    loss = jax.block_until_ready(loss)

    ref = _reference(predict, target)
    assert jnp.isfinite(loss)
    assert jnp.allclose(loss, ref, atol=2e-5, rtol=2e-5), (float(loss), float(ref))
    print("KERNEL_OK")
</pallas_src>

<mosaic_0001>
module attributes {stable_mosaic.version = 11 : i64} {
  func.func @_fl_plus_dice_kernel(%arg0: i32, %arg1: i32, %arg2: memref<1x4x8x128xi32, #tpu.memory_space<vmem>>, %arg3: memref<2x4x8x128xf32, #tpu.memory_space<vmem>>, %arg4: memref<2x8x128xi32, #tpu.memory_space<vmem>>, %arg5: memref<1x2x4x8x128xf32, #tpu.memory_space<vmem>>, %arg6: memref<1x2x4x8x128xf32, #tpu.memory_space<vmem>>, %arg7: memref<1x2x4x8x128xf32, #tpu.memory_space<vmem>>) attributes {dimension_semantics = [#tpu.dimension_semantics<parallel>, #tpu.dimension_semantics<arbitrary>], iteration_bounds = array<i64: 2, 1>, scalar_prefetch = 0 : i64, scratch_operands = 0 : i64, tpu.core_type = #tpu.core_type<tc>, window_params = [{pipeline_mode = #tpu.pipeline_mode<synchronous>, transform_indices = @transform_0, window_bounds = array<i64: 1, 4, 8, 128>}, {transform_indices = @transform_1, window_bounds = array<i64: 2, 4, 8, 128>}, {transform_indices = @transform_2, window_bounds = array<i64: 2, 8, 128>}, {transform_indices = @transform_3, window_bounds = array<i64: 1, 2, 4, 8, 128>}, {transform_indices = @transform_4, window_bounds = array<i64: 1, 2, 4, 8, 128>}, {transform_indices = @transform_5, window_bounds = array<i64: 1, 2, 4, 8, 128>}]} {
    %c0 = arith.constant 0 : index
    %c0_0 = arith.constant 0 : index
    %c0_1 = arith.constant 0 : index
    %c0_2 = arith.constant 0 : index
    %0 = vector.load %arg2[%c0, %c0_0, %c0_1, %c0_2] : memref<1x4x8x128xi32, #tpu.memory_space<vmem>>, vector<1x4x8x128xi32>
    %cst = arith.constant 0.000000e+00 : f32
    %1 = vector.broadcast %cst : f32 to vector<2x4x8x128xf32>
    %c0_i32 = arith.constant 0 : i32
    %c8_i32 = arith.constant 8 : i32
    %2 = arith.muli %c0_i32, %c8_i32 : i32
    %3 = tpu.assume_multiple %2, 8 : i32
    %c0_3 = arith.constant 0 : index
    %c0_4 = arith.constant 0 : index
    %4 = arith.index_cast %3 : i32 to index
    %c0_5 = arith.constant 0 : index
    %5 = vector.load %arg3[%c0_3, %c0_4, %4, %c0_5] : memref<2x4x8x128xf32, #tpu.memory_space<vmem>>, vector<2x4x8x128xf32>
    %c0_6 = arith.constant 0 : index
    %6 = arith.index_cast %3 : i32 to index
    %c0_7 = arith.constant 0 : index
    %7 = vector.load %arg4[%c0_6, %6, %c0_7] : memref<2x8x128xi32, #tpu.memory_space<vmem>>, vector<2x8x128xi32>
    %8 = vector.shape_cast %7 : vector<2x8x128xi32> to vector<2x1x8x128xi32>
    %9 = vector.broadcast %8 : vector<2x1x8x128xi32> to vector<2x4x8x128xi32>
    %10 = vector.broadcast %0 : vector<1x4x8x128xi32> to vector<2x4x8x128xi32>
    %11 = arith.cmpi eq, %9, %10 : vector<2x4x8x128xi32>
    %12 = arith.extui %11 : vector<2x4x8x128xi1> to vector<2x4x8x128xi32>
    %13 = arith.sitofp %12 : vector<2x4x8x128xi32> to vector<2x4x8x128xf32>
    %c0_i32_8 = arith.constant 0 : i32
    %14 = vector.broadcast %c0_i32_8 : i32 to vector<2x1x8x128xi32>
    %15 = arith.cmpi sge, %8, %14 : vector<2x1x8x128xi32>
    %16 = arith.extui %15 : vector<2x1x8x128xi1> to vector<2x1x8x128xi32>
    %17 = arith.sitofp %16 : vector<2x1x8x128xi32> to vector<2x1x8x128xf32>
    %cst_9 = arith.constant dense<0xFF800000> : vector<2x8x128xf32>
    %18 = vector.multi_reduction <maximumf>, %5, %cst_9 [1] : vector<2x4x8x128xf32> to vector<2x8x128xf32>
    %19 = vector.shape_cast %18 : vector<2x8x128xf32> to vector<2x1x8x128xf32>
    %20 = vector.broadcast %19 : vector<2x1x8x128xf32> to vector<2x4x8x128xf32>
    %21 = arith.subf %5, %20 : vector<2x4x8x128xf32>
    %22 = math.exp %21 : vector<2x4x8x128xf32>
    %cst_10 = arith.constant dense<0.000000e+00> : vector<2x8x128xf32>
    %23 = vector.multi_reduction <add>, %22, %cst_10 [1] : vector<2x4x8x128xf32> to vector<2x8x128xf32>
    %24 = vector.shape_cast %23 : vector<2x8x128xf32> to vector<2x1x8x128xf32>
    %cst_11 = arith.constant 1.000000e+00 : f32
    %25 = vector.broadcast %cst_11 : f32 to vector<2x1x8x128xf32>
    %26 = arith.divf %25, %24 : vector<2x1x8x128xf32>
    %27 = vector.broadcast %26 : vector<2x1x8x128xf32> to vector<2x4x8x128xf32>
    %28 = arith.mulf %22, %27 : vector<2x4x8x128xf32>
    %29 = arith.mulf %28, %13 : vector<2x4x8x128xf32>
    %30 = arith.addf %1, %29 : vector<2x4x8x128xf32>
    %31 = arith.mulf %28, %28 : vector<2x4x8x128xf32>
    %32 = vector.broadcast %17 : vector<2x1x8x128xf32> to vector<2x4x8x128xf32>
    %33 = arith.mulf %31, %32 : vector<2x4x8x128xf32>
    %34 = arith.addf %1, %33 : vector<2x4x8x128xf32>
    %35 = arith.addf %34, %13 : vector<2x4x8x128xf32>
    %36 = math.absf %5 : vector<2x4x8x128xf32>
    %cst_12 = arith.constant 0.000000e+00 : f32
    %37 = vector.broadcast %cst_12 : f32 to vector<2x4x8x128xf32>
    %38 = arith.subf %37, %36 : vector<2x4x8x128xf32>
    %39 = math.exp %38 : vector<2x4x8x128xf32>
    %40 = math.log1p %39 : vector<2x4x8x128xf32>
    %cst_13 = arith.constant 0.000000e+00 : f32
    %41 = vector.broadcast %cst_13 : f32 to vector<2x4x8x128xf32>
    %42 = arith.minimumf %5, %41 : vector<2x4x8x128xf32>
    %43 = arith.subf %42, %40 : vector<2x4x8x128xf32>
    %cst_14 = arith.constant 0.000000e+00 : f32
    %44 = vector.broadcast %cst_14 : f32 to vector<2x4x8x128xf32>
    %45 = arith.subf %44, %5 : vector<2x4x8x128xf32>
    %cst_15 = arith.constant 0.000000e+00 : f32
    %46 = vector.broadcast %cst_15 : f32 to vector<2x4x8x128xf32>
    %47 = arith.minimumf %45, %46 : vector<2x4x8x128xf32>
    %48 = arith.subf %47, %40 : vector<2x4x8x128xf32>
    %cst_16 = arith.constant 1.000000e+00 : f32
    %49 = vector.broadcast %cst_16 : f32 to vector<2x4x8x128xf32>
    %50 = arith.addf %49, %39 : vector<2x4x8x128xf32>
    %cst_17 = arith.constant 1.000000e+00 : f32
    %51 = vector.broadcast %cst_17 : f32 to vector<2x4x8x128xf32>
    %52 = arith.divf %51, %50 : vector<2x4x8x128xf32>
    %cst_18 = arith.constant 0.000000e+00 : f32
    %53 = vector.broadcast %cst_18 : f32 to vector<2x4x8x128xf32>
    %54 = arith.cmpf oge, %5, %53 : vector<2x4x8x128xf32>
    %55 = arith.mulf %39, %52 : vector<2x4x8x128xf32>
    %56 = arith.select %54, %52, %55 : vector<2x4x8x128xi1>, vector<2x4x8x128xf32>
    %cst_19 = arith.constant 1.000000e+00 : f32
    %57 = vector.broadcast %cst_19 : f32 to vector<2x4x8x128xf32>
    %58 = arith.subf %57, %56 : vector<2x4x8x128xf32>
    %59 = arith.mulf %58, %58 : vector<2x4x8x128xf32>
    %cst_20 = arith.constant -2.500000e-01 : f32
    %60 = vector.broadcast %cst_20 : f32 to vector<2x4x8x128xf32>
    %61 = arith.mulf %60, %59 : vector<2x4x8x128xf32>
    %62 = arith.mulf %61, %43 : vector<2x4x8x128xf32>
    %63 = arith.mulf %56, %56 : vector<2x4x8x128xf32>
    %cst_21 = arith.constant -7.500000e-01 : f32
    %64 = vector.broadcast %cst_21 : f32 to vector<2x4x8x128xf32>
    %65 = arith.mulf %64, %63 : vector<2x4x8x128xf32>
    %66 = arith.mulf %65, %48 : vector<2x4x8x128xf32>
    %67 = arith.mulf %13, %62 : vector<2x4x8x128xf32>
    %68 = arith.addf %1, %67 : vector<2x4x8x128xf32>
    %69 = vector.broadcast %17 : vector<2x1x8x128xf32> to vector<2x4x8x128xf32>
    %70 = arith.subf %69, %13 : vector<2x4x8x128xf32>
    %71 = arith.mulf %70, %66 : vector<2x4x8x128xf32>
    %72 = arith.addf %68, %71 : vector<2x4x8x128xf32>
    %c1_i32 = arith.constant 1 : i32
    %c0_i32_22 = arith.constant 0 : i32
    %73 = arith.cmpi eq, %arg1, %c0_i32_22 : i32
    %74 = arith.extui %73 : i1 to i32
    %c0_i32_23 = arith.constant 0 : i32
    %75 = arith.cmpi ne, %74, %c0_i32_23 : i32
    scf.if %75 {
      %c0_26 = arith.constant 0 : index
      %c0_27 = arith.constant 0 : index
      %c0_28 = arith.constant 0 : index
      %c0_29 = arith.constant 0 : index
      %c0_30 = arith.constant 0 : index
      %79 = vector.load %arg5[%c0_26, %c0_27, %c0_28, %c0_29, %c0_30] : memref<1x2x4x8x128xf32, #tpu.memory_space<vmem>>, vector<1x2x4x8x128xf32>
      %80 = vector.shape_cast %79 : vector<1x2x4x8x128xf32> to vector<2x4x8x128xf32>
      %81 = vector.shape_cast %30 : vector<2x4x8x128xf32> to vector<1x2x4x8x128xf32>
      tpu.vector_store %arg5[%c0_26, %c0_27, %c0_28, %c0_29, %c0_30], %81 {strides = array<i32>} : memref<1x2x4x8x128xf32, #tpu.memory_space<vmem>>, vector<1x2x4x8x128xf32>,
      %c0_31 = arith.constant 0 : index
      %c0_32 = arith.constant 0 : index
      %c0_33 = arith.constant 0 : index
      %c0_34 = arith.constant 0 : index
      %c0_35 = arith.constant 0 : index
      %82 = vector.load %arg6[%c0_31, %c0_32, %c0_33, %c0_34, %c0_35] : memref<1x2x4x8x128xf32, #tpu.memory_space<vmem>>, vector<1x2x4x8x128xf32>
      %83 = vector.shape_cast %82 : vector<1x2x4x8x128xf32> to vector<2x4x8x128xf32>
      %84 = vector.shape_cast %35 : vector<2x4x8x128xf32> to vector<1x2x4x8x128xf32>
      tpu.vector_store %arg6[%c0_31, %c0_32, %c0_33, %c0_34, %c0_35], %84 {strides = array<i32>} : memref<1x2x4x8x128xf32, #tpu.memory_space<vmem>>, vector<1x2x4x8x128xf32>,
      %c0_36 = arith.constant 0 : index
      %c0_37 = arith.constant 0 : index
      %c0_38 = arith.constant 0 : index
      %c0_39 = arith.constant 0 : index
      %c0_40 = arith.constant 0 : index
      %85 = vector.load %arg7[%c0_36, %c0_37, %c0_38, %c0_39, %c0_40] : memref<1x2x4x8x128xf32, #tpu.memory_space<vmem>>, vector<1x2x4x8x128xf32>
      %86 = vector.shape_cast %85 : vector<1x2x4x8x128xf32> to vector<2x4x8x128xf32>
      %87 = vector.shape_cast %72 : vector<2x4x8x128xf32> to vector<1x2x4x8x128xf32>
      tpu.vector_store %arg7[%c0_36, %c0_37, %c0_38, %c0_39, %c0_40], %87 {strides = array<i32>} : memref<1x2x4x8x128xf32, #tpu.memory_space<vmem>>, vector<1x2x4x8x128xf32>,
    } else {
    }
    %c0_i32_24 = arith.constant 0 : i32
    %76 = arith.cmpi sgt, %arg1, %c0_i32_24 : i32
    %77 = arith.extui %76 : i1 to i32
    %c0_i32_25 = arith.constant 0 : i32
    %78 = arith.cmpi ne, %77, %c0_i32_25 : i32
    scf.if %78 {
      %c0_26 = arith.constant 0 : index
      %c0_27 = arith.constant 0 : index
      %c0_28 = arith.constant 0 : index
      %c0_29 = arith.constant 0 : index
      %c0_30 = arith.constant 0 : index
      %79 = vector.load %arg5[%c0_26, %c0_27, %c0_28, %c0_29, %c0_30] : memref<1x2x4x8x128xf32, #tpu.memory_space<vmem>>, vector<1x2x4x8x128xf32>
      %80 = vector.shape_cast %79 : vector<1x2x4x8x128xf32> to vector<2x4x8x128xf32>
      %81 = arith.addf %80, %30 : vector<2x4x8x128xf32>
      %c0_31 = arith.constant 0 : index
      %c0_32 = arith.constant 0 : index
      %c0_33 = arith.constant 0 : index
      %c0_34 = arith.constant 0 : index
      %c0_35 = arith.constant 0 : index
      %82 = vector.load %arg5[%c0_31, %c0_32, %c0_33, %c0_34, %c0_35] : memref<1x2x4x8x128xf32, #tpu.memory_space<vmem>>, vector<1x2x4x8x128xf32>
      %83 = vector.shape_cast %82 : vector<1x2x4x8x128xf32> to vector<2x4x8x128xf32>
      %84 = vector.shape_cast %81 : vector<2x4x8x128xf32> to vector<1x2x4x8x128xf32>
      tpu.vector_store %arg5[%c0_31, %c0_32, %c0_33, %c0_34, %c0_35], %84 {strides = array<i32>} : memref<1x2x4x8x128xf32, #tpu.memory_space<vmem>>, vector<1x2x4x8x128xf32>,
      %c0_36 = arith.constant 0 : index
      %c0_37 = arith.constant 0 : index
      %c0_38 = arith.constant 0 : index
      %c0_39 = arith.constant 0 : index
      %c0_40 = arith.constant 0 : index
      %85 = vector.load %arg6[%c0_36, %c0_37, %c0_38, %c0_39, %c0_40] : memref<1x2x4x8x128xf32, #tpu.memory_space<vmem>>, vector<1x2x4x8x128xf32>
      %86 = vector.shape_cast %85 : vector<1x2x4x8x128xf32> to vector<2x4x8x128xf32>
      %87 = arith.addf %86, %35 : vector<2x4x8x128xf32>
      %c0_41 = arith.constant 0 : index
      %c0_42 = arith.constant 0 : index
      %c0_43 = arith.constant 0 : index
      %c0_44 = arith.constant 0 : index
      %c0_45 = arith.constant 0 : index
      %88 = vector.load %arg6[%c0_41, %c0_42, %c0_43, %c0_44, %c0_45] : memref<1x2x4x8x128xf32, #tpu.memory_space<vmem>>, vector<1x2x4x8x128xf32>
      %89 = vector.shape_cast %88 : vector<1x2x4x8x128xf32> to vector<2x4x8x128xf32>
      %90 = vector.shape_cast %87 : vector<2x4x8x128xf32> to vector<1x2x4x8x128xf32>
      tpu.vector_store %arg6[%c0_41, %c0_42, %c0_43, %c0_44, %c0_45], %90 {strides = array<i32>} : memref<1x2x4x8x128xf32, #tpu.memory_space<vmem>>, vector<1x2x4x8x128xf32>,
      %c0_46 = arith.constant 0 : index
      %c0_47 = arith.constant 0 : index
      %c0_48 = arith.constant 0 : index
      %c0_49 = arith.constant 0 : index
      %c0_50 = arith.constant 0 : index
      %91 = vector.load %arg7[%c0_46, %c0_47, %c0_48, %c0_49, %c0_50] : memref<1x2x4x8x128xf32, #tpu.memory_space<vmem>>, vector<1x2x4x8x128xf32>
      %92 = vector.shape_cast %91 : vector<1x2x4x8x128xf32> to vector<2x4x8x128xf32>
      %93 = arith.addf %92, %72 : vector<2x4x8x128xf32>
      %c0_51 = arith.constant 0 : index
      %c0_52 = arith.constant 0 : index
      %c0_53 = arith.constant 0 : index
      %c0_54 = arith.constant 0 : index
      %c0_55 = arith.constant 0 : index
      %94 = vector.load %arg7[%c0_51, %c0_52, %c0_53, %c0_54, %c0_55] : memref<1x2x4x8x128xf32, #tpu.memory_space<vmem>>, vector<1x2x4x8x128xf32>
      %95 = vector.shape_cast %94 : vector<1x2x4x8x128xf32> to vector<2x4x8x128xf32>
      %96 = vector.shape_cast %93 : vector<2x4x8x128xf32> to vector<1x2x4x8x128xf32>
      tpu.vector_store %arg7[%c0_51, %c0_52, %c0_53, %c0_54, %c0_55], %96 {strides = array<i32>} : memref<1x2x4x8x128xf32, #tpu.memory_space<vmem>>, vector<1x2x4x8x128xf32>,
    } else {
    }
    return
  }
  func.func @transform_0(%arg0: i32, %arg1: i32) -> (i32, i32, i32, i32) {
    %c0_i32 = arith.constant 0 : i32
    %c0_i32_0 = arith.constant 0 : i32
    %c0_i32_1 = arith.constant 0 : i32
    %c0_i32_2 = arith.constant 0 : i32
    %c0_i32_3 = arith.constant 0 : i32
    return %c0_i32, %c0_i32_0, %c0_i32_1, %c0_i32_2 : i32, i32, i32, i32
  }
  func.func @transform_1(%arg0: i32, %arg1: i32) -> (i32, i32, i32, i32) {
    %c1_i32 = arith.constant 1 : i32
    %0 = arith.muli %arg0, %c1_i32 : i32
    %1 = arith.addi %0, %arg1 : i32
    %c0_i32 = arith.constant 0 : i32
    %c0_i32_0 = arith.constant 0 : i32
    %c0_i32_1 = arith.constant 0 : i32
    %c0_i32_2 = arith.constant 0 : i32
    return %c0_i32, %c0_i32_0, %1, %c0_i32_1 : i32, i32, i32, i32
  }
  func.func @transform_2(%arg0: i32, %arg1: i32) -> (i32, i32, i32) {
    %c1_i32 = arith.constant 1 : i32
    %0 = arith.muli %arg0, %c1_i32 : i32
    %1 = arith.addi %0, %arg1 : i32
    %c0_i32 = arith.constant 0 : i32
    %c0_i32_0 = arith.constant 0 : i32
    %c0_i32_1 = arith.constant 0 : i32
    return %c0_i32, %1, %c0_i32_0 : i32, i32, i32
  }
  func.func @transform_3(%arg0: i32, %arg1: i32) -> (i32, i32, i32, i32, i32) {
    %c0_i32 = arith.constant 0 : i32
    %c0_i32_0 = arith.constant 0 : i32
    %c0_i32_1 = arith.constant 0 : i32
    %c0_i32_2 = arith.constant 0 : i32
    %c0_i32_3 = arith.constant 0 : i32
    return %arg0, %c0_i32, %c0_i32_0, %c0_i32_1, %c0_i32_2 : i32, i32, i32, i32, i32
  }
  func.func @transform_4(%arg0: i32, %arg1: i32) -> (i32, i32, i32, i32, i32) {
    %c0_i32 = arith.constant 0 : i32
    %c0_i32_0 = arith.constant 0 : i32
    %c0_i32_1 = arith.constant 0 : i32
    %c0_i32_2 = arith.constant 0 : i32
    %c0_i32_3 = arith.constant 0 : i32
    return %arg0, %c0_i32, %c0_i32_0, %c0_i32_1, %c0_i32_2 : i32, i32, i32, i32, i32
  }
  func.func @transform_5(%arg0: i32, %arg1: i32) -> (i32, i32, i32, i32, i32) {
    %c0_i32 = arith.constant 0 : i32
    %c0_i32_0 = arith.constant 0 : i32
    %c0_i32_1 = arith.constant 0 : i32
    %c0_i32_2 = arith.constant 0 : i32
    %c0_i32_3 = arith.constant 0 : i32
    return %arg0, %c0_i32, %c0_i32_0, %c0_i32_1, %c0_i32_2 : i32, i32, i32, i32, i32
  }
}

</mosaic_0001>

<llo_original>
// kernel: tpu_custom_call.1
$region0: #{tpu_custom_call.1}
  #allocation0 [shape = 'u32[]', space=smem, size = 0x4, offset = 0x4, fixed_abs, tag = 'smem constant byte address 0x4 - core index']
  #allocation1 [shape = 'u32[144,128]{1,0:T(1,128)}', space=vmem, size = 0x12000, scoped, tag = 'internal scratch']
  %s0 = inlined_call_operand.hbm [shape: s32[1,4,8,128], index: 0, kind: input, shape index: {}]
  %s1 = inlined_call_operand.hbm [shape: f32[2,4,16,128], index: 1, kind: input, shape index: {}]
  %s2 = inlined_call_operand.hbm [shape: s32[2,16,128], index: 2, kind: input, shape index: {}]
  %s3 = inlined_call_operand.hbm [shape: f32[2,2,4,8,128], index: 3, kind: output, shape index: {0}]
  %s4 = inlined_call_operand.hbm [shape: f32[2,2,4,8,128], index: 4, kind: output, shape index: {1}]
  %s5 = inlined_call_operand.hbm [shape: f32[2,2,4,8,128], index: 5, kind: output, shape index: {2}]
  %6 = xla_tuple %s3, %s4, %s5
  %s7 = sld [smem:[#allocation0]]
  $region81: #{tpu_custom_call.1} parent=0
    _
  %s9 = ssub.s32 1, %s7
  %s10 = scalar_select 0, %s9, %s7
  $region1: #{tpu_custom_call.1} parent=0
    #allocation2 [shape = 'u8[16384]{0}', space=vmem, size = 0x4000, scoped, tag = 'input window, operand 0, single buffered']
    #allocation3 [shape = 's32[2]{0}', space=sflag, size = 0x8, scoped, tag = 'scoped memory for tpu_custom_call.1']
    #allocation4 [shape = 's32[2]{0}', space=sflag, size = 0x8, scoped, tag = 'scoped memory for tpu_custom_call.1']
    #allocation5 [shape = 'u8[65536]{0}', space=vmem, size = 0x10000, scoped, tag = 'input window, operand 1']
    #allocation6 [shape = 's32[2]{0}', space=sflag, size = 0x8, scoped, tag = 'scoped memory for tpu_custom_call.1']
    #allocation7 [shape = 'u8[16384]{0}', space=vmem, size = 0x4000, scoped, tag = 'input window, operand 2']
    #allocation8 [shape = 'u8[65536]{0}', space=vmem, size = 0x10000, scoped, tag = 'output window, operand 0']
    #allocation9 [shape = 'u8[65536]{0}', space=vmem, size = 0x10000, scoped, tag = 'output window, operand 1']
    #allocation10 [shape = 's32[2]{0}', space=sflag, size = 0x8, scoped, tag = 'scoped memory for tpu_custom_call.1']
    #allocation11 [shape = 'u8[65536]{0}', space=vmem, size = 0x10000, scoped, tag = 'output window, operand 2']
    %11 = vsyncpa [#allocation3], 0
    %12 = vsyncpa [#allocation6], 0
    %s13 = scalar_lea.sflag [#allocation6], 1
    %14 = vsyncpa %s13, 0
    %15 = vsyncpa [#allocation4], 0
    %s16 = scalar_lea.sflag [#allocation4], 1
    %17 = vsyncpa %s16, 0
    %18 = vsyncpa [#allocation10], 0
    %s19 = scalar_lea.sflag [#allocation10], 1
    %20 = vsyncpa %s19, 0
    loop: start=0, step=1, limit=4
    $region2: #{tpu_custom_call.1} parent=1 // loop_pre_header
      _
    $region3: #{tpu_custom_call.1} parent=1 // loop_header
      %s22 = sphi 0, %s26
      %p23 = scmp.ge.s32.totalorder %s22, 4
      %s29 = sphi 0, %s41
      %s30 = sphi 0, %s37
      %s31 = sphi 0, %s29
      %s32 = sphi 0, %s30
      %s33 = sphi 0, %s31
      %s34 = sphi 0, %s32
      %s42 = sphi 0, %s42
      %s44 = sphi 0, %s42
      %s45 = sphi 0, %s44
      %s59 = sphi 0, %s45
      %s67 = sphi 0, %s69
      %s70 = sphi 0, %s67
      %s71 = sphi 0, %s70
      %s87 = sphi 0, %s71
      %s95 = sphi 0, %s97
      %s98 = sphi 0, %s95
      %s99 = sphi 0, %s98
      %s115 = sphi 0, %s99
      %s121 = sphi 0, %s123
      %s124 = sphi 0, %s121
      %s125 = sphi 0, %s124
      %s141 = sphi 0, %s125
      %s147 = sphi 0, %s149
      %s150 = sphi 0, %s147
      %s151 = sphi 0, %s150
      %s167 = sphi 0, %s151
      %s173 = sphi 0, %s175
      %s176 = sphi 0, %s173
      %s177 = sphi 0, %s176
      %s193 = sphi 0, %s177
    $region4: #{tpu_custom_call.1} parent=1 // loop_header_branch
      %25 = sbr.rel (%p23) target = $region8
    $region5: #{tpu_custom_call.1} parent=1 // loop_body
      %s27 = ssub.s32 %s22, 1
      %s28 = ssub.s32 %s22, 2
      %s35 = sadd.s32 1, %s30
      %p36 = scmp.ge.s32.totalorder %s35, 1
      %s37 = scalar_select %p36, 0, %s35
      %s38 = sadd.s32 1, %s29
      %s39 = scalar_select %p36, %s38, %s29
      %p40 = scmp.ge.s32.totalorder %s39, 2
      %s41 = scalar_select %p40, 0, %s39
      %s43 = sadd.s32 %s42, 1
      %p46 = scmp.eq.s32.totalorder %s22, 1
      %p47 = scmp.ne.s32.totalorder %s42, %s44
      %p48 = scmp.eq.s32.totalorder %s22, 0
      %p49 = por %p47, %p48
      %p50 = scmp.ne.s32.totalorder %s42, %s44
      %p51 = scmp.eq.s32.totalorder %s27, 1
      %p52 = por %p50, %p51
      %p53 = scmp.ne.s32.totalorder %s44, %s45
      %p54 = scmp.eq.s32.totalorder %s27, 0
      %p55 = por %p53, %p54
      %p56 = scmp.ne.s32.totalorder %s44, %s45
      %p57 = scmp.eq.s32.totalorder %s28, 1
      %p58 = por %p56, %p57
      %p60 = scmp.ne.s32.totalorder %s45, %s59
      %p61 = scmp.eq.s32.totalorder %s28, 0
      %p62 = por %p60, %p61
      %s63 = sadd.s32 %s29, %s30
      %s64 = sadd.s32 %s41, %s37
      %s65 = ssub.s32 %s63, %s64
      %p66 = scmp.eq.s32.totalorder %s65, 0
      %s68 = sadd.s32 %s67, 1
      %s69 = scalar_select %p66, %s67, %s68
      %p72 = pneg %p66
      %p73 = scmp.eq.s32.totalorder %s22, 1
      %p74 = por %p72, %p73
      %p75 = scmp.ne.s32.totalorder %s67, %s70
      %p76 = scmp.eq.s32.totalorder %s22, 0
      %p77 = por %p75, %p76
      %p78 = scmp.ne.s32.totalorder %s67, %s70
      %p79 = scmp.eq.s32.totalorder %s27, 1
      %p80 = por %p78, %p79
      %p81 = scmp.ne.s32.totalorder %s70, %s71
      %p82 = scmp.eq.s32.totalorder %s27, 0
      %p83 = por %p81, %p82
      %p84 = scmp.ne.s32.totalorder %s70, %s71
      %p85 = scmp.eq.s32.totalorder %s28, 1
      %p86 = por %p84, %p85
      %p88 = scmp.ne.s32.totalorder %s71, %s87
      %p89 = scmp.eq.s32.totalorder %s28, 0
      %p90 = por %p88, %p89
      %s91 = sadd.s32 %s29, %s30
      %s92 = sadd.s32 %s41, %s37
      %s93 = ssub.s32 %s91, %s92
      %p94 = scmp.eq.s32.totalorder %s93, 0
      %s96 = sadd.s32 %s95, 1
      %s97 = scalar_select %p94, %s95, %s96
      %p100 = pneg %p94
      %p101 = scmp.eq.s32.totalorder %s22, 1
      %p102 = por %p100, %p101
      %p103 = scmp.ne.s32.totalorder %s95, %s98
      %p104 = scmp.eq.s32.totalorder %s22, 0
      %p105 = por %p103, %p104
      %p106 = scmp.ne.s32.totalorder %s95, %s98
      %p107 = scmp.eq.s32.totalorder %s27, 1
      %p108 = por %p106, %p107
      %p109 = scmp.ne.s32.totalorder %s98, %s99
      %p110 = scmp.eq.s32.totalorder %s27, 0
      %p111 = por %p109, %p110
      %p112 = scmp.ne.s32.totalorder %s98, %s99
      %p113 = scmp.eq.s32.totalorder %s28, 1
      %p114 = por %p112, %p113
      %p116 = scmp.ne.s32.totalorder %s99, %s115
      %p117 = scmp.eq.s32.totalorder %s28, 0
      %p118 = por %p116, %p117
      %s119 = ssub.s32 %s29, %s41
      %p120 = scmp.eq.s32.totalorder %s119, 0
      %s122 = sadd.s32 %s121, 1
      %s123 = scalar_select %p120, %s121, %s122
      %p126 = pneg %p120
      %p127 = scmp.eq.s32.totalorder %s22, 1
      %p128 = por %p126, %p127
      %p129 = scmp.ne.s32.totalorder %s121, %s124
      %p130 = scmp.eq.s32.totalorder %s22, 0
      %p131 = por %p129, %p130
      %p132 = scmp.ne.s32.totalorder %s121, %s124
      %p133 = scmp.eq.s32.totalorder %s27, 1
      %p134 = por %p132, %p133
      %p135 = scmp.ne.s32.totalorder %s124, %s125
      %p136 = scmp.eq.s32.totalorder %s27, 0
      %p137 = por %p135, %p136
      %p138 = scmp.ne.s32.totalorder %s124, %s125
      %p139 = scmp.eq.s32.totalorder %s28, 1
      %p140 = por %p138, %p139
      %p142 = scmp.ne.s32.totalorder %s125, %s141
      %p143 = scmp.eq.s32.totalorder %s28, 0
      %p144 = por %p142, %p143
      %s145 = ssub.s32 %s29, %s41
      %p146 = scmp.eq.s32.totalorder %s145, 0
      %s148 = sadd.s32 %s147, 1
      %s149 = scalar_select %p146, %s147, %s148
      %p152 = pneg %p146
      %p153 = scmp.eq.s32.totalorder %s22, 1
      %p154 = por %p152, %p153
      %p155 = scmp.ne.s32.totalorder %s147, %s150
      %p156 = scmp.eq.s32.totalorder %s22, 0
      %p157 = por %p155, %p156
      %p158 = scmp.ne.s32.totalorder %s147, %s150
      %p159 = scmp.eq.s32.totalorder %s27, 1
      %p160 = por %p158, %p159
      %p161 = scmp.ne.s32.totalorder %s150, %s151
      %p162 = scmp.eq.s32.totalorder %s27, 0
      %p163 = por %p161, %p162
      %p164 = scmp.ne.s32.totalorder %s150, %s151
      %p165 = scmp.eq.s32.totalorder %s28, 1
      %p166 = por %p164, %p165
      %p168 = scmp.ne.s32.totalorder %s151, %s167
      %p169 = scmp.eq.s32.totalorder %s28, 0
      %p170 = por %p168, %p169
      %s171 = ssub.s32 %s29, %s41
      %p172 = scmp.eq.s32.totalorder %s171, 0
      %s174 = sadd.s32 %s173, 1
      %s175 = scalar_select %p172, %s173, %s174
      %p178 = pneg %p172
      %p179 = scmp.eq.s32.totalorder %s22, 1
      %p180 = por %p178, %p179
      %p181 = scmp.ne.s32.totalorder %s173, %s176
      %p182 = scmp.eq.s32.totalorder %s22, 0
      %p183 = por %p181, %p182
      %p184 = scmp.ne.s32.totalorder %s173, %s176
      %p185 = scmp.eq.s32.totalorder %s27, 1
      %p186 = por %p184, %p185
      %p187 = scmp.ne.s32.totalorder %s176, %s177
      %p188 = scmp.eq.s32.totalorder %s27, 0
      %p189 = por %p187, %p188
      %p190 = scmp.ne.s32.totalorder %s176, %s177
      %p191 = scmp.eq.s32.totalorder %s28, 1
      %p192 = por %p190, %p191
      %p194 = scmp.ne.s32.totalorder %s177, %s193
      %p195 = scmp.eq.s32.totalorder %s28, 0
      %p196 = por %p194, %p195
      %p197 = scmp.le.s32.totalorder 1, %s22
      %p198 = scmp.lt.s32.totalorder %s22, 3
      %p199 = pnand %p197, %p198
      %p200 = pneg %p199
      // Predicated region
      $region9: #{tpu_custom_call.1} parent=5 // pred_check
        _
      $region10: #{tpu_custom_call.1} parent=5 // pred_check_branch
        %202 = sbr.rel (%p199) target = $region12
      $region11: #{tpu_custom_call.1} parent=5 // pred_region
        %s203 = ssub.s32 %s22, 1
        // Predicated region
        $region13: #{tpu_custom_call.1} parent=11 // pred_check
          %p204 = pneg %p55
        $region14: #{tpu_custom_call.1} parent=11 // pred_check_branch
          %206 = sbr.rel (%p204) target = $region16
        $region15: #{tpu_custom_call.1} parent=11 // pred_region
          %s208 = ssub.s32 512, 512
          %209 = vsyncadd [#allocation3], %s208
          %s210 = sshll.u32 [#allocation2], 4
          %s211 = int_to_ptr.vmem [resolvable:$true] %s210
          %216 = dma.hbm_to_vmem [thread:$0]  %s0, 512, %s211, [#allocation3], 128, 128, 8
        $region16: #{tpu_custom_call.1} parent=11 // pred_fallthru
          _
      $region12: #{tpu_custom_call.1} parent=5 // pred_fallthru
        _
      %p217 = scmp.lt.s32.totalorder %s22, 2
      // Predicated region
      $region17: #{tpu_custom_call.1} parent=5 // pred_check
        %p218 = pneg %p217
      $region18: #{tpu_custom_call.1} parent=5 // pred_check_branch
        %220 = sbr.rel (%p218) target = $region20
      $region19: #{tpu_custom_call.1} parent=5 // pred_region
        // Predicated region
        $region21: #{tpu_custom_call.1} parent=19 // pred_check
          %p221 = pneg %p77
        $region22: #{tpu_custom_call.1} parent=19 // pred_check_branch
          %223 = sbr.rel (%p221) target = $region24
        $region23: #{tpu_custom_call.1} parent=19 // pred_region
          %s224 = sand.u32 %s22, 1
          %s225 = scalar_lea.sflag [#allocation6], %s224
          %s226 = sand.u32 %s67, 1
          %s227 = smul.addr %s226, 64
          %s228 = scalar_lea.vmem [#allocation5], %s227
          %s229 = sadd.s32 %s29, %s30
          %s231 = ssub.s32 1024, 1024
          %232 = vsyncadd %s225, %s231
          %s233 = smul.addr %s229, 128
          %s234 = scalar_lea.hbm %s1, %s233
          %s235 = sshll.u32 %s228, 4
          %s236 = int_to_ptr.vmem [resolvable:$true] %s235
          %241 = dma.hbm_to_vmem [thread:$0]  %s234, 1024, %s236, %s225, 256, 128, 8
        $region24: #{tpu_custom_call.1} parent=19 // pred_fallthru
          _
        // Predicated region
        $region25: #{tpu_custom_call.1} parent=19 // pred_check
          %p242 = pneg %p105
        $region26: #{tpu_custom_call.1} parent=19 // pred_check_branch
          %244 = sbr.rel (%p242) target = $region28
        $region27: #{tpu_custom_call.1} parent=19 // pred_region
          %s245 = sand.u32 %s22, 1
          %s246 = scalar_lea.sflag [#allocation6], %s245
          %s247 = sand.u32 %s95, 1
          %s248 = smul.addr %s247, 16
          %s249 = scalar_lea.vmem [#allocation7], %s248
          %s250 = sadd.s32 %s29, %s30
          %s252 = ssub.s32 256, 256
          %253 = vsyncadd %s246, %s252
          %s254 = smul.addr %s250, 128
          %s255 = scalar_lea.hbm %s2, %s254
          %s256 = sshll.u32 %s249, 4
          %s257 = int_to_ptr.vmem [resolvable:$true] %s256
          %262 = dma.hbm_to_vmem [thread:$0]  %s255, 256, %s257, %s246, 256, 128, 8
        $region28: #{tpu_custom_call.1} parent=19 // pred_fallthru
          _
      $region20: #{tpu_custom_call.1} parent=5 // pred_fallthru
        _
      %p263 = scmp.le.s32.totalorder 1, %s22
      %p264 = scmp.lt.s32.totalorder %s22, 3
      %p265 = pnand %p263, %p264
      %p266 = pneg %p265
      // Predicated region
      $region29: #{tpu_custom_call.1} parent=5 // pred_check
        _
      $region30: #{tpu_custom_call.1} parent=5 // pred_check_branch
        %268 = sbr.rel (%p265) target = $region32
      $region31: #{tpu_custom_call.1} parent=5 // pred_region
        %s269 = ssub.s32 %s22, 1
        // Predicated region
        $region33: #{tpu_custom_call.1} parent=31 // pred_check
          %p270 = pneg %p55
        $region34: #{tpu_custom_call.1} parent=31 // pred_check_branch
          %272 = sbr.rel (%p270) target = $region36
        $region35: #{tpu_custom_call.1} parent=31 // pred_region
          %273 = dma.done [#allocation3], 512
        $region36: #{tpu_custom_call.1} parent=31 // pred_fallthru
          _
        %s274 = sand.u32 %s27, 1
        %s275 = scalar_lea.sflag [#allocation6], %s274
        %s276 = sand.u32 %s70, 1
        %s277 = smul.addr %s276, 64
        %s278 = scalar_lea.vmem [#allocation5], %s277
        // Predicated region
        $region37: #{tpu_custom_call.1} parent=31 // pred_check
          %p279 = pneg %p83
        $region38: #{tpu_custom_call.1} parent=31 // pred_check_branch
          %281 = sbr.rel (%p279) target = $region40
        $region39: #{tpu_custom_call.1} parent=31 // pred_region
          %282 = dma.done %s275, 1024
        $region40: #{tpu_custom_call.1} parent=31 // pred_fallthru
          _
        %s283 = sand.u32 %s27, 1
        %s284 = scalar_lea.sflag [#allocation6], %s283
        %s285 = sand.u32 %s98, 1
        %s286 = smul.addr %s285, 16
        %s287 = scalar_lea.vmem [#allocation7], %s286
        // Predicated region
        $region41: #{tpu_custom_call.1} parent=31 // pred_check
          %p288 = pneg %p111
        $region42: #{tpu_custom_call.1} parent=31 // pred_check_branch
          %290 = sbr.rel (%p288) target = $region44
        $region43: #{tpu_custom_call.1} parent=31 // pred_region
          %291 = dma.done %s284, 256
        $region44: #{tpu_custom_call.1} parent=31 // pred_fallthru
          _
        %p292 = pneg %p55
        %p293 = pneg %p52
        %s294 = sand.u32 %s27, 1
        %s295 = scalar_lea.sflag [#allocation6], %s294
        %s296 = sand.u32 %s70, 1
        %s297 = smul.addr %s296, 64
        %s298 = scalar_lea.vmem [#allocation5], %s297
        %p299 = pneg %p83
        %p300 = pneg %p80
        %s301 = sand.u32 %s27, 1
        %s302 = scalar_lea.sflag [#allocation6], %s301
        %s303 = sand.u32 %s98, 1
        %s304 = smul.addr %s303, 16
        %s305 = scalar_lea.vmem [#allocation7], %s304
        %p306 = pneg %p111
        %p307 = pneg %p108
        %p308 = pneg %p137
        %p309 = pneg %p134
        %s310 = sand.u32 %s124, 1
        %s311 = scalar_lea.sflag [#allocation4], %s310
        %s312 = sand.u32 %s124, 1
        %s313 = smul.addr %s312, 64
        %s314 = scalar_lea.vmem [#allocation8], %s313
        %p315 = pneg %p163
        %p316 = pneg %p160
        %s317 = sand.u32 %s27, 1
        %s318 = scalar_lea.sflag [#allocation10], %s317
        %s319 = sand.u32 %s150, 1
        %s320 = smul.addr %s319, 64
        %s321 = scalar_lea.vmem [#allocation9], %s320
        %p322 = pneg %p189
        %p323 = pneg %p186
        %s324 = sand.u32 %s27, 1
        %s325 = scalar_lea.sflag [#allocation10], %s324
        %s326 = sand.u32 %s176, 1
        %s327 = smul.addr %s326, 64
        %s328 = scalar_lea.vmem [#allocation11], %s327
        %s329 = sadd.s32 %s31, %s32
        %s330 = sadd.s32 %s31, %s32
        %v331 = vld [vmem:[#allocation2] sm:$0xff]
        %v332 = vld [vmem:[#allocation2 + $0x8] sm:$0xff]
        %v333 = vld [vmem:[#allocation2 + $0x10] sm:$0xff]
        %v334 = vld [vmem:[#allocation2 + $0x18] sm:$0xff]
        %v335 = vld [vmem:[%s278] sm:$0xff]
        %v336 = vld [vmem:[%s278 + $0x8] sm:$0xff]
        %v337 = vld [vmem:[%s278 + $0x10] sm:$0xff]
        %v338 = vld [vmem:[%s278 + $0x18] sm:$0xff]
        %v339 = vld [vmem:[%s278 + $0x20] sm:$0xff]
        %v340 = vld [vmem:[%s278 + $0x28] sm:$0xff]
        %v341 = vld [vmem:[%s278 + $0x30] sm:$0xff]
        %v342 = vld [vmem:[%s278 + $0x38] sm:$0xff]
        %v343 = vld [vmem:[%s287] sm:$0xff]
        %v344 = vld [vmem:[%s287 + $0x8] sm:$0xff]
        %vm345 = vcmp.eq.s32.totalorder %v343, %v331
        %vm346 = vcmp.eq.s32.totalorder %v343, %v332
        %vm347 = vcmp.eq.s32.totalorder %v343, %v333
        %vm348 = vcmp.eq.s32.totalorder %v343, %v334
        %vm349 = vcmp.eq.s32.totalorder %v344, %v331
        %vm350 = vcmp.eq.s32.totalorder %v344, %v332
        %vm351 = vcmp.eq.s32.totalorder %v344, %v333
        %vm352 = vcmp.eq.s32.totalorder %v344, %v334
        %v353 = vsel %vm345, 1, 0
        %v354 = vsel %vm346, 1, 0
        %v355 = vsel %vm347, 1, 0
        %v356 = vsel %vm348, 1, 0
        %v357 = vsel %vm349, 1, 0
        %v358 = vsel %vm350, 1, 0
        %v359 = vsel %vm351, 1, 0
        %v360 = vsel %vm352, 1, 0
        %v361 = vcvt.s32.f32 %v353
        %v362 = vcvt.s32.f32 %v354
        %v363 = vcvt.s32.f32 %v355
        %v364 = vcvt.s32.f32 %v356
        %v365 = vcvt.s32.f32 %v357
        %v366 = vcvt.s32.f32 %v358
        %v367 = vcvt.s32.f32 %v359
        %v368 = vcvt.s32.f32 %v360
        %vm369 = vcmp.ge.s32.totalorder %v343, 0
        %vm370 = vcmp.ge.s32.totalorder %v344, 0
        %v371 = vsel %vm369, 1, 0
        %v372 = vsel %vm370, 1, 0
        %v373 = vcvt.s32.f32 %v371
        %v374 = vcvt.s32.f32 %v372
        %v375 = vmax.f32 %v335, %v337
        %v376 = vmax.f32 %v336, %v338
        %v377 = vmax.f32 %v375, %v376
        %v378 = vmax.f32 %v339, %v341
        %v379 = vmax.f32 %v340, %v342
        %v380 = vmax.f32 %v378, %v379
        %v381 = vsub.f32 %v335, %v377
        %v382 = vsub.f32 %v336, %v377
        %v383 = vsub.f32 %v337, %v377
        %v384 = vsub.f32 %v338, %v377
        %v385 = vsub.f32 %v339, %v380
        %v386 = vsub.f32 %v340, %v380
        %v387 = vsub.f32 %v341, %v380
        %v388 = vsub.f32 %v342, %v380
        %v389 = vmul.f32 %v381, 1.442695
        %v390 = vpow.pop %v389
        %v391 = vmul.f32 %v382, 1.442695
        %v392 = vpow.pop %v391
        %v393 = vmul.f32 %v383, 1.442695
        %v394 = vpow.pop %v393
        %v395 = vmul.f32 %v384, 1.442695
        %v396 = vpow.pop %v395
        %v397 = vmul.f32 %v385, 1.442695
        %v398 = vpow.pop %v397
        %v399 = vmul.f32 %v386, 1.442695
        %v400 = vpow.pop %v399
        %v401 = vmul.f32 %v387, 1.442695
        %v402 = vpow.pop %v401
        %v403 = vmul.f32 %v388, 1.442695
        %v404 = vpow.pop %v403
        %v405 = vadd.f32 %v390, %v392
        %v406 = vadd.f32 %v405, %v394
        %v407 = vadd.f32 %v406, %v396
        %v408 = vadd.f32 %v398, %v400
        %v409 = vadd.f32 %v408, %v402
        %v410 = vadd.f32 %v409, %v404
        %v411 = vrcp.pop %v407
        %v412 = vmul.f32 1.0, %v411
        %v413 = vrcp.pop %v410
        %v414 = vmul.f32 1.0, %v413
        %v415 = vmul.f32 %v390, %v412
        %v416 = vmul.f32 %v392, %v412
        %v417 = vmul.f32 %v394, %v412
        %v418 = vmul.f32 %v396, %v412
        %v419 = vmul.f32 %v398, %v414
        %v420 = vmul.f32 %v400, %v414
        %v421 = vmul.f32 %v402, %v414
        %v422 = vmul.f32 %v404, %v414
        %v423 = vmul.f32 %v415, %v361
        %v424 = vmul.f32 %v416, %v362
        %v425 = vmul.f32 %v417, %v363
        %v426 = vmul.f32 %v418, %v364
        %v427 = vmul.f32 %v419, %v365
        %v428 = vmul.f32 %v420, %v366
        %v429 = vmul.f32 %v421, %v367
        %v430 = vmul.f32 %v422, %v368
        %v431 = vadd.f32 %v423, 0.0
        %v432 = vadd.f32 %v424, 0.0
        %v433 = vadd.f32 %v425, 0.0
        %v434 = vadd.f32 %v426, 0.0
        %v435 = vadd.f32 %v427, 0.0
        %v436 = vadd.f32 %v428, 0.0
        %v437 = vadd.f32 %v429, 0.0
        %v438 = vadd.f32 %v430, 0.0
        %v439 = vmul.f32 %v415, %v415
        %v440 = vmul.f32 %v416, %v416
        %v441 = vmul.f32 %v417, %v417
        %v442 = vmul.f32 %v418, %v418
        %v443 = vmul.f32 %v419, %v419
        %v444 = vmul.f32 %v420, %v420
        %v445 = vmul.f32 %v421, %v421
        %v446 = vmul.f32 %v422, %v422
        %v447 = vmul.f32 %v439, %v373
        %v448 = vmul.f32 %v440, %v373
        %v449 = vmul.f32 %v441, %v373
        %v450 = vmul.f32 %v442, %v373
        %v451 = vmul.f32 %v443, %v374
        %v452 = vmul.f32 %v444, %v374
        %v453 = vmul.f32 %v445, %v374
        %v454 = vmul.f32 %v446, %v374
        %v455 = vadd.f32 %v447, 0.0
        %v456 = vadd.f32 %v448, 0.0
        %v457 = vadd.f32 %v449, 0.0
        %v458 = vadd.f32 %v450, 0.0
        %v459 = vadd.f32 %v451, 0.0
        %v460 = vadd.f32 %v452, 0.0
        %v461 = vadd.f32 %v453, 0.0
        %v462 = vadd.f32 %v454, 0.0
        %v463 = vadd.f32 %v455, %v361
        %v464 = vadd.f32 %v456, %v362
        %v465 = vadd.f32 %v457, %v363
        %v466 = vadd.f32 %v458, %v364
        %v467 = vadd.f32 %v459, %v365
        %v468 = vadd.f32 %v460, %v366
        %v469 = vadd.f32 %v461, %v367
        %v470 = vadd.f32 %v462, %v368
        %v471 = vand.u32 2147483647, %v335
        %v472 = vand.u32 2147483647, %v336
        %v473 = vand.u32 2147483647, %v337
        %v474 = vand.u32 2147483647, %v338
        %v475 = vand.u32 2147483647, %v339
        %v476 = vand.u32 2147483647, %v340
        %v477 = vand.u32 2147483647, %v341
        %v478 = vand.u32 2147483647, %v342
        %v479 = vsub.f32 0.0, %v471
        %v480 = vsub.f32 0.0, %v472
        %v481 = vsub.f32 0.0, %v473
        %v482 = vsub.f32 0.0, %v474
        %v483 = vsub.f32 0.0, %v475
        %v484 = vsub.f32 0.0, %v476
        %v485 = vsub.f32 0.0, %v477
        %v486 = vsub.f32 0.0, %v478
        %v487 = vmul.f32 %v479, 1.442695
        %v488 = vpow.pop %v487
        %v489 = vmul.f32 %v480, 1.442695
        %v490 = vpow.pop %v489
        %v491 = vmul.f32 %v481, 1.442695
        %v492 = vpow.pop %v491
        %v493 = vmul.f32 %v482, 1.442695
        %v494 = vpow.pop %v493
        %v495 = vmul.f32 %v483, 1.442695
        %v496 = vpow.pop %v495
        %v497 = vmul.f32 %v484, 1.442695
        %v498 = vpow.pop %v497
        %v499 = vmul.f32 %v485, 1.442695
        %v500 = vpow.pop %v499
        %v501 = vmul.f32 %v486, 1.442695
        %v502 = vpow.pop %v501
        %v503 = vadd.f32 %v488, 1.0
        %v504 = vlog2.pop %v503
        %v505 = vmul.f32 %v504, 0.6931472
        %v506 = vmul.f32 -0.5, %v488
        %v507 = vadd.f32 %v506, 1.0
        %v508 = vmul.f32 %v507, %v488
        %v509 = vand.u32 2147483647, %v488
        %vm510 = vcmp.lt.f32.partialorder %v509, 0.0004427343
        %v511 = vsel %vm510, %v508, %v505
        %v512 = vadd.f32 %v490, 1.0
        %v513 = vlog2.pop %v512
        %v514 = vmul.f32 %v513, 0.6931472
        %v515 = vmul.f32 -0.5, %v490
        %v516 = vadd.f32 %v515, 1.0
        %v517 = vmul.f32 %v516, %v490
        %v518 = vand.u32 2147483647, %v490
        %vm519 = vcmp.lt.f32.partialorder %v518, 0.0004427343
        %v520 = vsel %vm519, %v517, %v514
        %v521 = vadd.f32 %v492, 1.0
        %v522 = vlog2.pop %v521
        %v523 = vmul.f32 %v522, 0.6931472
        %v524 = vmul.f32 -0.5, %v492
        %v525 = vadd.f32 %v524, 1.0
        %v526 = vmul.f32 %v525, %v492
        %v527 = vand.u32 2147483647, %v492
        %vm528 = vcmp.lt.f32.partialorder %v527, 0.0004427343
        %v529 = vsel %vm528, %v526, %v523
        %v530 = vadd.f32 %v494, 1.0
        %v531 = vlog2.pop %v530
        %v532 = vmul.f32 %v531, 0.6931472
        %v533 = vmul.f32 -0.5, %v494
        %v534 = vadd.f32 %v533, 1.0
        %v535 = vmul.f32 %v534, %v494
        %v536 = vand.u32 2147483647, %v494
        %vm537 = vcmp.lt.f32.partialorder %v536, 0.0004427343
        %v538 = vsel %vm537, %v535, %v532
        %v539 = vadd.f32 %v496, 1.0
        %v540 = vlog2.pop %v539
        %v541 = vmul.f32 %v540, 0.6931472
        %v542 = vmul.f32 -0.5, %v496
        %v543 = vadd.f32 %v542, 1.0
        %v544 = vmul.f32 %v543, %v496
        %v545 = vand.u32 2147483647, %v496
        %vm546 = vcmp.lt.f32.partialorder %v545, 0.0004427343
        %v547 = vsel %vm546, %v544, %v541
        %v548 = vadd.f32 %v498, 1.0
        %v549 = vlog2.pop %v548
        %v550 = vmul.f32 %v549, 0.6931472
        %v551 = vmul.f32 -0.5, %v498
        %v552 = vadd.f32 %v551, 1.0
        %v553 = vmul.f32 %v552, %v498
        %v554 = vand.u32 2147483647, %v498
        %vm555 = vcmp.lt.f32.partialorder %v554, 0.0004427343
        %v556 = vsel %vm555, %v553, %v550
        %v557 = vadd.f32 %v500, 1.0
        %v558 = vlog2.pop %v557
        %v559 = vmul.f32 %v558, 0.6931472
        %v560 = vmul.f32 -0.5, %v500
        %v561 = vadd.f32 %v560, 1.0
        %v562 = vmul.f32 %v561, %v500
        %v563 = vand.u32 2147483647, %v500
        %vm564 = vcmp.lt.f32.partialorder %v563, 0.0004427343
        %v565 = vsel %vm564, %v562, %v559
        %v566 = vadd.f32 %v502, 1.0
        %v567 = vlog2.pop %v566
        %v568 = vmul.f32 %v567, 0.6931472
        %v569 = vmul.f32 -0.5, %v502
        %v570 = vadd.f32 %v569, 1.0
        %v571 = vmul.f32 %v570, %v502
        %v572 = vand.u32 2147483647, %v502
        %vm573 = vcmp.lt.f32.partialorder %v572, 0.0004427343
        %v574 = vsel %vm573, %v571, %v568
        %v575 = vmin.f32 %v335, 0.0
        %v576 = vmin.f32 %v336, 0.0
        %v577 = vmin.f32 %v337, 0.0
        %v578 = vmin.f32 %v338, 0.0
        %v579 = vmin.f32 %v339, 0.0
        %v580 = vmin.f32 %v340, 0.0
        %v581 = vmin.f32 %v341, 0.0
        %v582 = vmin.f32 %v342, 0.0
        %v583 = vsub.f32 %v575, %v511
        %v584 = vsub.f32 %v576, %v520
        %v585 = vsub.f32 %v577, %v529
        %v586 = vsub.f32 %v578, %v538
        %v587 = vsub.f32 %v579, %v547
        %v588 = vsub.f32 %v580, %v556
        %v589 = vsub.f32 %v581, %v565
        %v590 = vsub.f32 %v582, %v574
        %v591 = vsub.f32 0.0, %v335
        %v592 = vsub.f32 0.0, %v336
        %v593 = vsub.f32 0.0, %v337
        %v594 = vsub.f32 0.0, %v338
        %v595 = vsub.f32 0.0, %v339
        %v596 = vsub.f32 0.0, %v340
        %v597 = vsub.f32 0.0, %v341
        %v598 = vsub.f32 0.0, %v342
        %v599 = vmin.f32 %v591, 0.0
        %v600 = vmin.f32 %v592, 0.0
        %v601 = vmin.f32 %v593, 0.0
        %v602 = vmin.f32 %v594, 0.0
        %v603 = vmin.f32 %v595, 0.0
        %v604 = vmin.f32 %v596, 0.0
        %v605 = vmin.f32 %v597, 0.0
        %v606 = vmin.f32 %v598, 0.0
        %v607 = vsub.f32 %v599, %v511
        %v608 = vsub.f32 %v600, %v520
        %v609 = vsub.f32 %v601, %v529
        %v610 = vsub.f32 %v602, %v538
        %v611 = vsub.f32 %v603, %v547
        %v612 = vsub.f32 %v604, %v556
        %v613 = vsub.f32 %v605, %v565
        %v614 = vsub.f32 %v606, %v574
        %v615 = vadd.f32 %v488, 1.0
        %v616 = vadd.f32 %v490, 1.0
        %v617 = vadd.f32 %v492, 1.0
        %v618 = vadd.f32 %v494, 1.0
        %v619 = vadd.f32 %v496, 1.0
        %v620 = vadd.f32 %v498, 1.0
        %v621 = vadd.f32 %v500, 1.0
        %v622 = vadd.f32 %v502, 1.0
        %v623 = vrcp.pop %v615
        %v624 = vmul.f32 1.0, %v623
        %v625 = vrcp.pop %v616
        %v626 = vmul.f32 1.0, %v625
        %v627 = vrcp.pop %v617
        %v628 = vmul.f32 1.0, %v627
        %v629 = vrcp.pop %v618
        %v630 = vmul.f32 1.0, %v629
        %v631 = vrcp.pop %v619
        %v632 = vmul.f32 1.0, %v631
        %v633 = vrcp.pop %v620
        %v634 = vmul.f32 1.0, %v633
        %v635 = vrcp.pop %v621
        %v636 = vmul.f32 1.0, %v635
        %v637 = vrcp.pop %v622
        %v638 = vmul.f32 1.0, %v637
        %vm639 = vcmp.ge.f32.partialorder %v335, 0.0
        %vm640 = vcmp.ge.f32.partialorder %v336, 0.0
        %vm641 = vcmp.ge.f32.partialorder %v337, 0.0
        %vm642 = vcmp.ge.f32.partialorder %v338, 0.0
        %vm643 = vcmp.ge.f32.partialorder %v339, 0.0
        %vm644 = vcmp.ge.f32.partialorder %v340, 0.0
        %vm645 = vcmp.ge.f32.partialorder %v341, 0.0
        %vm646 = vcmp.ge.f32.partialorder %v342, 0.0
        %v647 = vmul.f32 %v488, %v624
        %v648 = vmul.f32 %v490, %v626
        %v649 = vmul.f32 %v492, %v628
        %v650 = vmul.f32 %v494, %v630
        %v651 = vmul.f32 %v496, %v632
        %v652 = vmul.f32 %v498, %v634
        %v653 = vmul.f32 %v500, %v636
        %v654 = vmul.f32 %v502, %v638
        %v655 = vsel %vm639, %v624, %v647
        %v656 = vsel %vm640, %v626, %v648
        %v657 = vsel %vm641, %v628, %v649
        %v658 = vsel %vm642, %v630, %v650
        %v659 = vsel %vm643, %v632, %v651
        %v660 = vsel %vm644, %v634, %v652
        %v661 = vsel %vm645, %v636, %v653
        %v662 = vsel %vm646, %v638, %v654
        %v663 = vsub.f32 1.0, %v655
        %v664 = vsub.f32 1.0, %v656
        %v665 = vsub.f32 1.0, %v657
        %v666 = vsub.f32 1.0, %v658
        %v667 = vsub.f32 1.0, %v659
        %v668 = vsub.f32 1.0, %v660
        %v669 = vsub.f32 1.0, %v661
        %v670 = vsub.f32 1.0, %v662
        %v671 = vmul.f32 %v663, %v663
        %v672 = vmul.f32 %v664, %v664
        %v673 = vmul.f32 %v665, %v665
        %v674 = vmul.f32 %v666, %v666
        %v675 = vmul.f32 %v667, %v667
        %v676 = vmul.f32 %v668, %v668
        %v677 = vmul.f32 %v669, %v669
        %v678 = vmul.f32 %v670, %v670
        %v679 = vmul.f32 %v671, -0.25
        %v680 = vmul.f32 %v672, -0.25
        %v681 = vmul.f32 %v673, -0.25
        %v682 = vmul.f32 %v674, -0.25
        %v683 = vmul.f32 %v675, -0.25
        %v684 = vmul.f32 %v676, -0.25
        %v685 = vmul.f32 %v677, -0.25
        %v686 = vmul.f32 %v678, -0.25
        %v687 = vmul.f32 %v679, %v583
        %v688 = vmul.f32 %v680, %v584
        %v689 = vmul.f32 %v681, %v585
        %v690 = vmul.f32 %v682, %v586
        %v691 = vmul.f32 %v683, %v587
        %v692 = vmul.f32 %v684, %v588
        %v693 = vmul.f32 %v685, %v589
        %v694 = vmul.f32 %v686, %v590
        %v695 = vmul.f32 %v655, %v655
        %v696 = vmul.f32 %v656, %v656
        %v697 = vmul.f32 %v657, %v657
        %v698 = vmul.f32 %v658, %v658
        %v699 = vmul.f32 %v659, %v659
        %v700 = vmul.f32 %v660, %v660
        %v701 = vmul.f32 %v661, %v661
        %v702 = vmul.f32 %v662, %v662
        %v703 = vmul.f32 %v695, -0.75
        %v704 = vmul.f32 %v696, -0.75
        %v705 = vmul.f32 %v697, -0.75
        %v706 = vmul.f32 %v698, -0.75
        %v707 = vmul.f32 %v699, -0.75
        %v708 = vmul.f32 %v700, -0.75
        %v709 = vmul.f32 %v701, -0.75
        %v710 = vmul.f32 %v702, -0.75
        %v711 = vmul.f32 %v703, %v607
        %v712 = vmul.f32 %v704, %v608
        %v713 = vmul.f32 %v705, %v609
        %v714 = vmul.f32 %v706, %v610
        %v715 = vmul.f32 %v707, %v611
        %v716 = vmul.f32 %v708, %v612
        %v717 = vmul.f32 %v709, %v613
        %v718 = vmul.f32 %v710, %v614
        %v719 = vmul.f32 %v361, %v687
        %v720 = vmul.f32 %v362, %v688
        %v721 = vmul.f32 %v363, %v689
        %v722 = vmul.f32 %v364, %v690
        %v723 = vmul.f32 %v365, %v691
        %v724 = vmul.f32 %v366, %v692
        %v725 = vmul.f32 %v367, %v693
        %v726 = vmul.f32 %v368, %v694
        %v727 = vadd.f32 %v719, 0.0
        %v728 = vadd.f32 %v720, 0.0
        %v729 = vadd.f32 %v721, 0.0
        %v730 = vadd.f32 %v722, 0.0
        %v731 = vadd.f32 %v723, 0.0
        %v732 = vadd.f32 %v724, 0.0
        %v733 = vadd.f32 %v725, 0.0
        %v734 = vadd.f32 %v726, 0.0
        %v735 = vsub.f32 %v373, %v361
        %v736 = vsub.f32 %v373, %v362
        %v737 = vsub.f32 %v373, %v363
        %v738 = vsub.f32 %v373, %v364
        %v739 = vsub.f32 %v374, %v365
        %v740 = vsub.f32 %v374, %v366
        %v741 = vsub.f32 %v374, %v367
        %v742 = vsub.f32 %v374, %v368
        %v743 = vmul.f32 %v735, %v711
        %v744 = vmul.f32 %v736, %v712
        %v745 = vmul.f32 %v737, %v713
        %v746 = vmul.f32 %v738, %v714
        %v747 = vmul.f32 %v739, %v715
        %v748 = vmul.f32 %v740, %v716
        %v749 = vmul.f32 %v741, %v717
        %v750 = vmul.f32 %v742, %v718
        %v751 = vadd.f32 %v727, %v743
        %v752 = vadd.f32 %v728, %v744
        %v753 = vadd.f32 %v729, %v745
        %v754 = vadd.f32 %v730, %v746
        %v755 = vadd.f32 %v731, %v747
        %v756 = vadd.f32 %v732, %v748
        %v757 = vadd.f32 %v733, %v749
        %v758 = vadd.f32 %v734, %v750
        %p759 = scmp.eq.s32.totalorder %s32, 0
        // Predicated region
        $region45: #{tpu_custom_call.1} parent=31 // pred_check
          %p760 = pneg %p759
        $region46: #{tpu_custom_call.1} parent=31 // pred_check_branch
          %762 = sbr.rel (%p760) target = $region48
        $region47: #{tpu_custom_call.1} parent=31 // pred_region
          %763 = vst [vmem:[%s314] sm:$0xff] %v431
          %764 = vst [vmem:[%s314 + $0x8] sm:$0xff] %v432
          %765 = vst [vmem:[%s314 + $0x10] sm:$0xff] %v433
          %766 = vst [vmem:[%s314 + $0x18] sm:$0xff] %v434
          %767 = vst [vmem:[%s314 + $0x20] sm:$0xff] %v435
          %768 = vst [vmem:[%s314 + $0x28] sm:$0xff] %v436
          %769 = vst [vmem:[%s314 + $0x30] sm:$0xff] %v437
          %770 = vst [vmem:[%s314 + $0x38] sm:$0xff] %v438
          %771 = vst [vmem:[%s321] sm:$0xff] %v463
          %772 = vst [vmem:[%s321 + $0x8] sm:$0xff] %v464
          %773 = vst [vmem:[%s321 + $0x10] sm:$0xff] %v465
          %774 = vst [vmem:[%s321 + $0x18] sm:$0xff] %v466
          %775 = vst [vmem:[%s321 + $0x20] sm:$0xff] %v467
          %776 = vst [vmem:[%s321 + $0x28] sm:$0xff] %v468
          %777 = vst [vmem:[%s321 + $0x30] sm:$0xff] %v469
          %778 = vst [vmem:[%s321 + $0x38] sm:$0xff] %v470
          %779 = vst [vmem:[%s328] sm:$0xff] %v751
          %780 = vst [vmem:[%s328 + $0x8] sm:$0xff] %v752
          %781 = vst [vmem:[%s328 + $0x10] sm:$0xff] %v753
          %782 = vst [vmem:[%s328 + $0x18] sm:$0xff] %v754
          %783 = vst [vmem:[%s328 + $0x20] sm:$0xff] %v755
          %784 = vst [vmem:[%s328 + $0x28] sm:$0xff] %v756
          %785 = vst [vmem:[%s328 + $0x30] sm:$0xff] %v757
          %786 = vst [vmem:[%s328 + $0x38] sm:$0xff] %v758
        $region48: #{tpu_custom_call.1} parent=31 // pred_fallthru
          _
        %p787 = scmp.gt.s32.totalorder %s32, 0
        // Predicated region
        $region49: #{tpu_custom_call.1} parent=31 // pred_check
          %p788 = pneg %p787
        $region50: #{tpu_custom_call.1} parent=31 // pred_check_branch
          %790 = sbr.rel (%p788) target = $region52
        $region51: #{tpu_custom_call.1} parent=31 // pred_region
          %v791 = vld [vmem:[%s314] sm:$0xff]
          %v792 = vld [vmem:[%s314 + $0x8] sm:$0xff]
          %v793 = vld [vmem:[%s314 + $0x10] sm:$0xff]
          %v794 = vld [vmem:[%s314 + $0x18] sm:$0xff]
          %v795 = vld [vmem:[%s314 + $0x20] sm:$0xff]
          %v796 = vld [vmem:[%s314 + $0x28] sm:$0xff]
          %v797 = vld [vmem:[%s314 + $0x30] sm:$0xff]
          %v798 = vld [vmem:[%s314 + $0x38] sm:$0xff]
          %v799 = vadd.f32 %v791, %v431
          %v800 = vadd.f32 %v792, %v432
          %v801 = vadd.f32 %v793, %v433
          %v802 = vadd.f32 %v794, %v434
          %v803 = vadd.f32 %v795, %v435
          %v804 = vadd.f32 %v796, %v436
          %v805 = vadd.f32 %v797, %v437
          %v806 = vadd.f32 %v798, %v438
          %807 = vst [vmem:[%s314] sm:$0xff] %v799
          %808 = vst [vmem:[%s314 + $0x8] sm:$0xff] %v800
          %809 = vst [vmem:[%s314 + $0x10] sm:$0xff] %v801
          %810 = vst [vmem:[%s314 + $0x18] sm:$0xff] %v802
          %811 = vst [vmem:[%s314 + $0x20] sm:$0xff] %v803
          %812 = vst [vmem:[%s314 + $0x28] sm:$0xff] %v804
          %813 = vst [vmem:[%s314 + $0x30] sm:$0xff] %v805
          %814 = vst [vmem:[%s314 + $0x38] sm:$0xff] %v806
          %v815 = vld [vmem:[%s321] sm:$0xff]
          %v816 = vld [vmem:[%s321 + $0x8] sm:$0xff]
          %v817 = vld [vmem:[%s321 + $0x10] sm:$0xff]
          %v818 = vld [vmem:[%s321 + $0x18] sm:$0xff]
          %v819 = vld [vmem:[%s321 + $0x20] sm:$0xff]
          %v820 = vld [vmem:[%s321 + $0x28] sm:$0xff]
          %v821 = vld [vmem:[%s321 + $0x30] sm:$0xff]
          %v822 = vld [vmem:[%s321 + $0x38] sm:$0xff]
          %v823 = vadd.f32 %v815, %v463
          %v824 = vadd.f32 %v816, %v464
          %v825 = vadd.f32 %v817, %v465
          %v826 = vadd.f32 %v818, %v466
          %v827 = vadd.f32 %v819, %v467
          %v828 = vadd.f32 %v820, %v468
          %v829 = vadd.f32 %v821, %v469
          %v830 = vadd.f32 %v822, %v470
          %831 = vst [vmem:[%s321] sm:$0xff] %v823
          %832 = vst [vmem:[%s321 + $0x8] sm:$0xff] %v824
          %833 = vst [vmem:[%s321 + $0x10] sm:$0xff] %v825
          %834 = vst [vmem:[%s321 + $0x18] sm:$0xff] %v826
          %835 = vst [vmem:[%s321 + $0x20] sm:$0xff] %v827
          %836 = vst [vmem:[%s321 + $0x28] sm:$0xff] %v828
          %837 = vst [vmem:[%s321 + $0x30] sm:$0xff] %v829
          %838 = vst [vmem:[%s321 + $0x38] sm:$0xff] %v830
          %v839 = vld [vmem:[%s328] sm:$0xff]
          %v840 = vld [vmem:[%s328 + $0x8] sm:$0xff]
          %v841 = vld [vmem:[%s328 + $0x10] sm:$0xff]
          %v842 = vld [vmem:[%s328 + $0x18] sm:$0xff]
          %v843 = vld [vmem:[%s328 + $0x20] sm:$0xff]
          %v844 = vld [vmem:[%s328 + $0x28] sm:$0xff]
          %v845 = vld [vmem:[%s328 + $0x30] sm:$0xff]
          %v846 = vld [vmem:[%s328 + $0x38] sm:$0xff]
          %v847 = vadd.f32 %v839, %v751
          %v848 = vadd.f32 %v840, %v752
          %v849 = vadd.f32 %v841, %v753
          %v850 = vadd.f32 %v842, %v754
          %v851 = vadd.f32 %v843, %v755
          %v852 = vadd.f32 %v844, %v756
          %v853 = vadd.f32 %v845, %v757
          %v854 = vadd.f32 %v846, %v758
          %855 = vst [vmem:[%s328] sm:$0xff] %v847
          %856 = vst [vmem:[%s328 + $0x8] sm:$0xff] %v848
          %857 = vst [vmem:[%s328 + $0x10] sm:$0xff] %v849
          %858 = vst [vmem:[%s328 + $0x18] sm:$0xff] %v850
          %859 = vst [vmem:[%s328 + $0x20] sm:$0xff] %v851
          %860 = vst [vmem:[%s328 + $0x28] sm:$0xff] %v852
          %861 = vst [vmem:[%s328 + $0x30] sm:$0xff] %v853
          %862 = vst [vmem:[%s328 + $0x38] sm:$0xff] %v854
        $region52: #{tpu_custom_call.1} parent=31 // pred_fallthru
          _
        %s863 = sand.u32 %s124, 1
        %s864 = scalar_lea.sflag [#allocation4], %s863
        %s865 = sand.u32 %s124, 1
        %s866 = smul.addr %s865, 64
        %s867 = scalar_lea.vmem [#allocation8], %s866
        %s868 = sand.u32 %s27, 1
        %s869 = scalar_lea.sflag [#allocation10], %s868
        %s870 = sand.u32 %s150, 1
        %s871 = smul.addr %s870, 64
        %s872 = scalar_lea.vmem [#allocation9], %s871
        %s873 = sand.u32 %s27, 1
        %s874 = scalar_lea.sflag [#allocation10], %s873
        %s875 = sand.u32 %s176, 1
        %s876 = smul.addr %s875, 64
        %s877 = scalar_lea.vmem [#allocation11], %s876
        // Predicated region
        $region53: #{tpu_custom_call.1} parent=31 // pred_check
          %p878 = pneg %p134
        $region54: #{tpu_custom_call.1} parent=31 // pred_check_branch
          %880 = sbr.rel (%p878) target = $region56
        $region55: #{tpu_custom_call.1} parent=31 // pred_region
          %s882 = ssub.s32 1024, 1024
          %883 = vsyncadd %s864, %s882
          %s884 = smul.addr %s31, 8
          %s885 = smul.addr %s884, 128
          %s886 = scalar_lea.hbm %s3, %s885
          %s887 = sshll.u32 %s867, 4
          %s888 = int_to_ptr.vmem [resolvable:$true] %s887
          %893 = dma.vmem_to_hbm [thread:$0]  %s888, 1024, %s886, %s864, 128, 128, 8
        $region56: #{tpu_custom_call.1} parent=31 // pred_fallthru
          _
        // Predicated region
        $region57: #{tpu_custom_call.1} parent=31 // pred_check
          %p894 = pneg %p160
        $region58: #{tpu_custom_call.1} parent=31 // pred_check_branch
          %896 = sbr.rel (%p894) target = $region60
        $region59: #{tpu_custom_call.1} parent=31 // pred_region
          %s898 = ssub.s32 1024, 1024
          %899 = vsyncadd %s869, %s898
          %s900 = smul.addr %s31, 8
          %s901 = smul.addr %s900, 128
          %s902 = scalar_lea.hbm %s4, %s901
          %s903 = sshll.u32 %s872, 4
          %s904 = int_to_ptr.vmem [resolvable:$true] %s903
          %909 = dma.vmem_to_hbm [thread:$0]  %s904, 1024, %s902, %s869, 128, 128, 8
        $region60: #{tpu_custom_call.1} parent=31 // pred_fallthru
          _
        // Predicated region
        $region61: #{tpu_custom_call.1} parent=31 // pred_check
          %p910 = pneg %p186
        $region62: #{tpu_custom_call.1} parent=31 // pred_check_branch
          %912 = sbr.rel (%p910) target = $region64
        $region63: #{tpu_custom_call.1} parent=31 // pred_region
          %s914 = ssub.s32 1024, 1024
          %915 = vsyncadd %s874, %s914
          %s916 = smul.addr %s31, 8
          %s917 = smul.addr %s916, 128
          %s918 = scalar_lea.hbm %s5, %s917
          %s919 = sshll.u32 %s877, 4
          %s920 = int_to_ptr.vmem [resolvable:$true] %s919
          %925 = dma.vmem_to_hbm [thread:$0]  %s920, 1024, %s918, %s874, 128, 128, 8
        $region64: #{tpu_custom_call.1} parent=31 // pred_fallthru
          _
      $region32: #{tpu_custom_call.1} parent=5 // pred_fallthru
        _
      %p926 = scmp.le.s32.totalorder 2, %s22
      // Predicated region
      $region65: #{tpu_custom_call.1} parent=5 // pred_check
        %p927 = pneg %p926
      $region66: #{tpu_custom_call.1} parent=5 // pred_check_branch
        %929 = sbr.rel (%p927) target = $region68
      $region67: #{tpu_custom_call.1} parent=5 // pred_region
        %s930 = ssub.s32 %s22, 2
        // Predicated region
        $region69: #{tpu_custom_call.1} parent=67 // pred_check
          %p931 = pneg %p140
        $region70: #{tpu_custom_call.1} parent=67 // pred_check_branch
          %933 = sbr.rel (%p931) target = $region72
        $region71: #{tpu_custom_call.1} parent=67 // pred_region
          %s934 = sand.u32 %s125, 1
          %s935 = scalar_lea.sflag [#allocation4], %s934
          %s936 = sand.u32 %s125, 1
          %s937 = smul.addr %s936, 64
          %s938 = scalar_lea.vmem [#allocation8], %s937
          %939 = dma.done %s935, 1024
        $region72: #{tpu_custom_call.1} parent=67 // pred_fallthru
          _
        // Predicated region
        $region73: #{tpu_custom_call.1} parent=67 // pred_check
          %p940 = pneg %p166
        $region74: #{tpu_custom_call.1} parent=67 // pred_check_branch
          %942 = sbr.rel (%p940) target = $region76
        $region75: #{tpu_custom_call.1} parent=67 // pred_region
          %s943 = sand.u32 %s28, 1
          %s944 = scalar_lea.sflag [#allocation10], %s943
          %s945 = sand.u32 %s151, 1
          %s946 = smul.addr %s945, 64
          %s947 = scalar_lea.vmem [#allocation9], %s946
          %948 = dma.done %s944, 1024
        $region76: #{tpu_custom_call.1} parent=67 // pred_fallthru
          _
        // Predicated region
        $region77: #{tpu_custom_call.1} parent=67 // pred_check
          %p949 = pneg %p192
        $region78: #{tpu_custom_call.1} parent=67 // pred_check_branch
          %951 = sbr.rel (%p949) target = $region80
        $region79: #{tpu_custom_call.1} parent=67 // pred_region
          %s952 = sand.u32 %s28, 1
          %s953 = scalar_lea.sflag [#allocation10], %s952
          %s954 = sand.u32 %s177, 1
          %s955 = smul.addr %s954, 64
          %s956 = scalar_lea.vmem [#allocation11], %s955
          %957 = dma.done %s953, 1024
        $region80: #{tpu_custom_call.1} parent=67 // pred_fallthru
          _
      $region68: #{tpu_custom_call.1} parent=5 // pred_fallthru
        _
    $region6: #{tpu_custom_call.1} parent=1 // loop_footer
      %s26 = sadd.s32 1, %s22
    $region7: #{tpu_custom_call.1} parent=1 // loop_footer_branch
      %21 = sbr.rel target = $region3
    $region8: #{tpu_custom_call.1} parent=1 // loop_exit
      _
    %958 = vsyncpa [#allocation3], 1
    %s959 = scalar_lea.sflag [#allocation3], 1
    %960 = vsyncpa %s959, 1
    %961 = vsyncpa [#allocation6], 1
    %s962 = scalar_lea.sflag [#allocation6], 1
    %963 = vsyncpa %s962, 1
    %964 = vsyncpa [#allocation4], 1
    %s965 = scalar_lea.sflag [#allocation4], 1
    %966 = vsyncpa %s965, 1
    %967 = vsyncpa [#allocation10], 1
    %s968 = scalar_lea.sflag [#allocation10], 1
    %969 = vsyncpa %s968, 1

</llo_original>
